<compile_context>
chip_gen: v7x
topology: tpu7x:2x2x1
jax: 0.10.0
libtpu: 0.0.40
codegen_flags: <defaults>
</compile_context>

<pallas_src>
import functools

import jax
import jax.numpy as jnp
from jax.experimental import pallas as pl
from jax.experimental.pallas import tpu as pltpu


def _round_up(n, m):
    return ((n + m - 1) // m) * m


def _vmem_budget_bytes():
    """Generation-aware VMEM limit: leave headroom under v7x's 64 MiB physical
    VMEM (-> 48 MiB), cap at 64 MiB on the 128 MiB parts (v5e/v6e)."""
    try:
        cap = pltpu.get_tpu_info().vmem_capacity_bytes
    except Exception:  # info unavailable at trace time -> conservative default
        cap = 64 << 20
    return min(64 << 20, (cap * 3) // 4)


def predictor_kernel(x_ref, w_ref, o_ref, *, eps):
    # x_ref: (bm, inc) input rows.  NOTE: the partial last batch tile may carry
    #        unspecified padding rows; every op below is row-independent and
    #        out-of-bounds output rows are masked on writeback, so this is safe.
    #        Do NOT add cross-row reductions here without masking.
    # w_ref: (inc, n_pad) bf16, transposed, 1/temp pre-folded, zero-padded cols.
    # o_ref: (bm, n_pad).
    x = x_ref[...].astype(jnp.float32)                      # upcast if bf16 input
    sq = jnp.sum(x * x, axis=-1, keepdims=True)             # (bm, 1) f32
    # F.normalize: x / max(||x||, eps)  ==  x * rsqrt(max(sq, eps^2))   (EUP op)
    inv_norm = jax.lax.rsqrt(jnp.maximum(sq, eps * eps))
    # Deferred normalization: scale the (bm, n_pad) accumulator instead of the
    # (bm, inc) operand -- identical math (per-row scalar), far less VALU work.
    acc = jnp.dot(x.astype(jnp.bfloat16), w_ref[...],
                  preferred_element_type=jnp.float32)       # f32 MXU accumulation
    o_ref[...] = (acc * inv_norm).astype(o_ref.dtype)


def prepare_weight(w, temp):
    """One-time weight prep (hoist out of the hot path / per-step loop).

    w: [num_class, inc] (PyTorch nn.Linear weight layout).
    Returns [inc, n_pad] bf16 with 1/temp folded in, zero-padded so the kernel
    output is lane-dense (last dim a multiple of 128 -> unmasked stores).
    Padding to exactly the next multiple of 128 (never 256): the kernel is
    HBM-bound, so a half-filled 256-wide MXU on v6e/v7x costs nothing, while
    padding further would double output DMA and the W tile for zero gain.
    """
    num_class, inc = w.shape
    n_pad = _round_up(num_class, 128)
    wt = (w.T / temp).astype(jnp.bfloat16)                  # [inc, num_class]
    if n_pad != num_class:
        wt = jnp.pad(wt, ((0, 0), (0, n_pad - num_class)))
    return wt


def predictor_forward(x, wt, num_class, *, eps=1e-12, block_m=512,
                      out_dtype=None, trim=True):
    """x: [B, inc] f32 (bf16 accepted; upcast in-kernel).
    wt: output of prepare_weight -> [inc, n_pad] bf16, 1/temp folded in.
    Returns [B, num_class] logits; with trim=False returns the lane-padded
    [B, n_pad] logits (zero columns beyond num_class), skipping one extra XLA
    slice kernel over the output."""
    B, inc = x.shape
    n_pad = wt.shape[1]
    out_dtype = x.dtype if out_dtype is None else out_dtype
    out_bytes = jnp.dtype(out_dtype).itemsize
    x_bytes = jnp.dtype(x.dtype).itemsize

    budget = _vmem_budget_bytes()

    # Batch tile: as large as fits, but >= 2 grid steps when B allows so the
    # "parallel" axis shards across v7x's two TensorCores (no-op on v5e/v6e).
    bm = min(block_m, _round_up(B, 8))
    if pl.cdiv(B, bm) < 2 and B > 8:
        bm = _round_up(pl.cdiv(B, 2), 8)

    def vmem_usage(m):
        return (2 * m * inc * x_bytes          # x stream, double-buffered
                + 2 * inc * n_pad * 2          # W bf16 (conservatively 2 bufs)
                + 2 * m * n_pad * out_bytes)   # output, double-buffered

    while bm > 8 and vmem_usage(bm) > (budget * 4) // 5:
        bm = _round_up(bm // 2, 8)
    assert vmem_usage(bm) <= (budget * 4) // 5, (
        "Resident weight/output tiles do not fit VMEM even at bm=8; num_class "
        "is too large for a single resident W tile -- add an N (class) grid "
        "axis tiling n_pad by 256-512.")

    grid = (pl.cdiv(B, bm),)
    kernel = functools.partial(predictor_kernel, eps=eps)

    def run(single_buffer_w):
        if single_buffer_w:
            # Grid-invariant weight tile: its second pipeline buffer is never
            # used, so request a single buffer and free inc*n_pad*2 bytes.
            w_spec = pl.BlockSpec((inc, n_pad), lambda i: (0, 0),
                                  pipeline_mode=pl.Buffered(1))
        else:
            w_spec = pl.BlockSpec((inc, n_pad), lambda i: (0, 0))
        return pl.pallas_call(
            kernel,
            out_shape=jax.ShapeDtypeStruct((B, n_pad), out_dtype),
            grid_spec=pltpu.PrefetchScalarGridSpec(
                num_scalar_prefetch=0,
                grid=grid,
                in_specs=[
                    pl.BlockSpec((bm, inc), lambda i: (i, 0)),
                    w_spec,
                ],
                out_specs=pl.BlockSpec((bm, n_pad), lambda i: (i, 0)),
            ),
            compiler_params=pltpu.CompilerParams(
                dimension_semantics=("parallel",),  # v7x: batch over both TCs
                vmem_limit_bytes=budget,
            ),
        )(x, wt)

    try:
        out_padded = run(single_buffer_w=True)
    except Exception:
        # pipeline_mode on a top-level pallas_call BlockSpec is not accepted by
        # every JAX version; fall back to default double-buffering (the extra
        # inc*n_pad*2 bytes are already accounted for in the budget above).
        out_padded = run(single_buffer_w=False)

    if trim and n_pad != num_class:
        # Tiny plain-JAX slice; pass trim=False to skip it when downstream can
        # simply ignore the zero-padded class columns.
        return out_padded[:, :num_class]
    return out_padded


def predictor_reference(x, w, *, temp=0.05, eps=1e-12):
    norm = jnp.sqrt(jnp.sum(x * x, axis=-1, keepdims=True))
    xn = x / jnp.maximum(norm, eps)
    return (xn @ w.T) / temp


if __name__ == "__main__":
    # Small shapes consistent with the module (original: inc=4096, num_class=64).
    B, inc, num_class, temp = 64, 512, 64, 0.05

    key = jax.random.PRNGKey(0)
    kx, kw = jax.random.split(key)
    x = jax.random.normal(kx, (B, inc), dtype=jnp.float32)
    # Deterministic init of the Linear weight [num_class, inc].
    w = jax.random.normal(kw, (num_class, inc), dtype=jnp.float32) * 0.02

    wt = prepare_weight(w, temp)                 # one-time prep (hoisted)
    out = predictor_forward(x, wt, num_class)    # trim=True -> [B, num_class]
    out = jax.block_until_ready(out)

    ref = predictor_reference(x, w, temp=temp)
    assert out.shape == (B, num_class)
    # bf16 MXU operands with f32 accumulation -> bf16-appropriate tolerance.
    assert jnp.allclose(out, ref, atol=2e-2, rtol=2e-2), float(
        jnp.max(jnp.abs(out - ref)))

    print("KERNEL_OK")
</pallas_src>

<mosaic_0001>
module attributes {stable_mosaic.version = 11 : i64} {
  func.func @predictor_kernel(%arg0: i32, %arg1: memref<32x512xf32, #tpu.memory_space<vmem>>, %arg2: memref<512x128xbf16, #tpu.memory_space<vmem>>, %arg3: memref<32x128xf32, #tpu.memory_space<vmem>>) attributes {dimension_semantics = [#tpu.dimension_semantics<parallel>], iteration_bounds = array<i64: 2>, scalar_prefetch = 0 : i64, scratch_operands = 0 : i64, tpu.core_type = #tpu.core_type<tc>, window_params = [{transform_indices = @transform_0, window_bounds = array<i64: 32, 512>}, {pipeline_mode = #tpu.pipeline_mode<synchronous>, transform_indices = @transform_1, window_bounds = array<i64: 512, 128>}, {transform_indices = @transform_2, window_bounds = array<i64: 32, 128>}]} {
    %c0 = arith.constant 0 : index
    %c0_0 = arith.constant 0 : index
    %0 = vector.load %arg1[%c0, %c0_0] : memref<32x512xf32, #tpu.memory_space<vmem>>, vector<32x512xf32>
    %1 = arith.mulf %0, %0 : vector<32x512xf32>
    %cst = arith.constant dense<0.000000e+00> : vector<32xf32>
    %2 = vector.multi_reduction <add>, %1, %cst [1] : vector<32x512xf32> to vector<32xf32>
    %3 = vector.shape_cast %2 : vector<32xf32> to vector<32x1xf32>
    %cst_1 = arith.constant 1.000000e-24 : f32
    %4 = vector.broadcast %cst_1 : f32 to vector<32x1xf32>
    %5 = arith.maximumf %3, %4 : vector<32x1xf32>
    %6 = math.rsqrt %5 : vector<32x1xf32>
    %7 = arith.truncf %0 : vector<32x512xf32> to vector<32x512xbf16>
    %c0_2 = arith.constant 0 : index
    %c0_3 = arith.constant 0 : index
    %8 = vector.load %arg2[%c0_2, %c0_3] : memref<512x128xbf16, #tpu.memory_space<vmem>>, vector<512x128xbf16>
    %cst_4 = arith.constant dense<0.000000e+00> : vector<32x128xf32>
    %9 = tpu.matmul %7, %8, %cst_4 {dimension_numbers = #tpu.dot_dimension_numbers<[1], [0], [0], [1], [0, 0, 1, 1], [], []>} : vector<32x512xbf16>, vector<512x128xbf16>, vector<32x128xf32> -> vector<32x128xf32>
    %10 = vector.broadcast %6 : vector<32x1xf32> to vector<32x128xf32>
    %11 = arith.mulf %9, %10 : vector<32x128xf32>
    %c0_5 = arith.constant 0 : index
    %c0_6 = arith.constant 0 : index
    %12 = vector.load %arg3[%c0_5, %c0_6] : memref<32x128xf32, #tpu.memory_space<vmem>>, vector<32x128xf32>
    tpu.vector_store %arg3[%c0_5, %c0_6], %11 {strides = array<i32>} : memref<32x128xf32, #tpu.memory_space<vmem>>, vector<32x128xf32>,
    return
  }
  func.func @transform_0(%arg0: i32) -> (i32, i32) {
    %c0_i32 = arith.constant 0 : i32
    %c0_i32_0 = arith.constant 0 : i32
    return %arg0, %c0_i32 : i32, i32
  }
  func.func @transform_1(%arg0: i32) -> (i32, i32) {
    %c0_i32 = arith.constant 0 : i32
    %c0_i32_0 = arith.constant 0 : i32
    %c0_i32_1 = arith.constant 0 : i32
    return %c0_i32, %c0_i32_0 : i32, i32
  }
  func.func @transform_2(%arg0: i32) -> (i32, i32) {
    %c0_i32 = arith.constant 0 : i32
    %c0_i32_0 = arith.constant 0 : i32
    return %arg0, %c0_i32 : i32, i32
  }
}

module attributes {stable_mosaic.version = 11 : i64} {
  func.func @predictor_kernel(%arg0: i32, %arg1: memref<32x512xf32, #tpu.memory_space<vmem>>, %arg2: memref<512x128xbf16, #tpu.memory_space<vmem>>, %arg3: memref<32x128xf32, #tpu.memory_space<vmem>>) attributes {dimension_semantics = [#tpu.dimension_semantics<parallel>], iteration_bounds = array<i64: 2>, scalar_prefetch = 0 : i64, scratch_operands = 0 : i64, tpu.core_type = #tpu.core_type<tc>, window_params = [{transform_indices = @transform_0, window_bounds = array<i64: 32, 512>}, {pipeline_mode = #tpu.pipeline_mode<synchronous>, transform_indices = @transform_1, window_bounds = array<i64: 512, 128>}, {transform_indices = @transform_2, window_bounds = array<i64: 32, 128>}]} {
    %c0 = arith.constant 0 : index
    %c0_0 = arith.constant 0 : index
    %0 = vector.load %arg1[%c0, %c0_0] : memref<32x512xf32, #tpu.memory_space<vmem>>, vector<32x512xf32>
    %1 = arith.mulf %0, %0 : vector<32x512xf32>
    %cst = arith.constant dense<0.000000e+00> : vector<32xf32>
    %2 = vector.multi_reduction <add>, %1, %cst [1] : vector<32x512xf32> to vector<32xf32>
    %3 = vector.shape_cast %2 : vector<32xf32> to vector<32x1xf32>
    %cst_1 = arith.constant 1.000000e-24 : f32
    %4 = vector.broadcast %cst_1 : f32 to vector<32x1xf32>
    %5 = arith.maximumf %3, %4 : vector<32x1xf32>
    %6 = math.rsqrt %5 : vector<32x1xf32>
    %7 = arith.truncf %0 : vector<32x512xf32> to vector<32x512xbf16>
    %c0_2 = arith.constant 0 : index
    %c0_3 = arith.constant 0 : index
    %8 = vector.load %arg2[%c0_2, %c0_3] : memref<512x128xbf16, #tpu.memory_space<vmem>>, vector<512x128xbf16>
    %cst_4 = arith.constant dense<0.000000e+00> : vector<32x128xf32>
    %9 = tpu.matmul %7, %8, %cst_4 {dimension_numbers = #tpu.dot_dimension_numbers<[1], [0], [0], [1], [0, 0, 1, 1], [], []>} : vector<32x512xbf16>, vector<512x128xbf16>, vector<32x128xf32> -> vector<32x128xf32>
    %10 = vector.broadcast %6 : vector<32x1xf32> to vector<32x128xf32>
    %11 = arith.mulf %9, %10 : vector<32x128xf32>
    %c0_5 = arith.constant 0 : index
    %c0_6 = arith.constant 0 : index
    %12 = vector.load %arg3[%c0_5, %c0_6] : memref<32x128xf32, #tpu.memory_space<vmem>>, vector<32x128xf32>
    tpu.vector_store %arg3[%c0_5, %c0_6], %11 {strides = array<i32>} : memref<32x128xf32, #tpu.memory_space<vmem>>, vector<32x128xf32>,
    return
  }
  func.func @transform_0(%arg0: i32) -> (i32, i32) {
    %c0_i32 = arith.constant 0 : i32
    %c0_i32_0 = arith.constant 0 : i32
    return %arg0, %c0_i32 : i32, i32
  }
  func.func @transform_1(%arg0: i32) -> (i32, i32) {
    %c0_i32 = arith.constant 0 : i32
    %c0_i32_0 = arith.constant 0 : i32
    %c0_i32_1 = arith.constant 0 : i32
    return %c0_i32, %c0_i32_0 : i32, i32
  }
  func.func @transform_2(%arg0: i32) -> (i32, i32) {
    %c0_i32 = arith.constant 0 : i32
    %c0_i32_0 = arith.constant 0 : i32
    return %arg0, %c0_i32 : i32, i32
  }
}

</mosaic_0001>

<llo_original>
// kernel: tpu_custom_call.1
$region0: #{tpu_custom_call.1}
  #allocation0 [shape = 'u32[]', space=smem, size = 0x4, offset = 0x4, fixed_abs, tag = 'smem constant byte address 0x4 - core index']
  #allocation1 [shape = 'u32[144,128]{1,0:T(1,128)}', space=vmem, size = 0x12000, scoped, tag = 'internal scratch']
  %s0 = inlined_call_operand.hbm [shape: f32[64,512], index: 0, kind: input, shape index: {}]
  %s1 = inlined_call_operand.hbm [shape: bf16[512,128], index: 1, kind: input, shape index: {}]
  %s2 = inlined_call_operand.hbm [shape: f32[64,128], index: 2, kind: output, shape index: {}]
  %s3 = sld [smem:[#allocation0]]
  $region49: #{tpu_custom_call.1} parent=0
    _
  %s5 = ssub.s32 1, %s3
  %s6 = scalar_select 0, %s5, %s3
  $region1: #{tpu_custom_call.1} parent=0
    #allocation2 [shape = 'u8[131072]{0}', space=vmem, size = 0x20000, scoped, tag = 'input window, operand 0']
    #allocation3 [shape = 's32[2]{0}', space=sflag, size = 0x8, scoped, tag = 'scoped memory for tpu_custom_call.1']
    #allocation4 [shape = 's32[2]{0}', space=sflag, size = 0x8, scoped, tag = 'scoped memory for tpu_custom_call.1']
    #allocation5 [shape = 'u8[131072]{0}', space=vmem, size = 0x20000, scoped, tag = 'input window, operand 1, single buffered']
    #allocation6 [shape = 's32[1]{0}', space=sflag, size = 0x4, scoped, tag = 'scoped memory for tpu_custom_call.1']
    #allocation7 [shape = 'u8[32768]{0}', space=vmem, size = 0x8000, scoped, tag = 'output window, operand 0']
    %7 = vsyncpa [#allocation3], 0
    %s8 = scalar_lea.sflag [#allocation3], 1
    %9 = vsyncpa %s8, 0
    %10 = vsyncpa [#allocation6], 0
    %11 = vsyncpa [#allocation4], 0
    %s12 = scalar_lea.sflag [#allocation4], 1
    %13 = vsyncpa %s12, 0
    loop: start=0, step=1, limit=4
    $region2: #{tpu_custom_call.1} parent=1 // loop_pre_header
      _
    $region3: #{tpu_custom_call.1} parent=1 // loop_header
      %s15 = sphi 0, %s19
      %p16 = scmp.ge.s32.totalorder %s15, 4
      %s25 = sphi 0, %s27
      %s28 = sphi 0, %s25
      %s29 = sphi 0, %s28
      %s45 = sphi 0, %s29
      %s49 = sphi 0, %s49
      %s51 = sphi 0, %s49
      %s52 = sphi 0, %s51
      %s66 = sphi 0, %s52
      %s72 = sphi 0, %s74
      %s75 = sphi 0, %s72
      %s76 = sphi 0, %s75
      %s92 = sphi 0, %s76
    $region4: #{tpu_custom_call.1} parent=1 // loop_header_branch
      %18 = sbr.rel (%p16) target = $region8
    $region5: #{tpu_custom_call.1} parent=1 // loop_body
      %s20 = ssub.s32 %s15, 1
      %s21 = ssub.s32 %s15, 2
      %s22 = sadd.s32 %s15, 1
      %s23 = ssub.s32 %s15, %s22
      %p24 = scmp.eq.s32.totalorder %s23, 0
      %s26 = sadd.s32 %s25, 1
      %s27 = scalar_select %p24, %s25, %s26
      %p30 = pneg %p24
      %p31 = scmp.eq.s32.totalorder %s15, 1
      %p32 = por %p30, %p31
      %p33 = scmp.ne.s32.totalorder %s25, %s28
      %p34 = scmp.eq.s32.totalorder %s15, 0
      %p35 = por %p33, %p34
      %p36 = scmp.ne.s32.totalorder %s25, %s28
      %p37 = scmp.eq.s32.totalorder %s20, 1
      %p38 = por %p36, %p37
      %p39 = scmp.ne.s32.totalorder %s28, %s29
      %p40 = scmp.eq.s32.totalorder %s20, 0
      %p41 = por %p39, %p40
      %p42 = scmp.ne.s32.totalorder %s28, %s29
      %p43 = scmp.eq.s32.totalorder %s21, 1
      %p44 = por %p42, %p43
      %p46 = scmp.ne.s32.totalorder %s29, %s45
      %p47 = scmp.eq.s32.totalorder %s21, 0
      %p48 = por %p46, %p47
      %s50 = sadd.s32 %s49, 1
      %p53 = scmp.eq.s32.totalorder %s15, 1
      %p54 = scmp.ne.s32.totalorder %s49, %s51
      %p55 = scmp.eq.s32.totalorder %s15, 0
      %p56 = por %p54, %p55
      %p57 = scmp.ne.s32.totalorder %s49, %s51
      %p58 = scmp.eq.s32.totalorder %s20, 1
      %p59 = por %p57, %p58
      %p60 = scmp.ne.s32.totalorder %s51, %s52
      %p61 = scmp.eq.s32.totalorder %s20, 0
      %p62 = por %p60, %p61
      %p63 = scmp.ne.s32.totalorder %s51, %s52
      %p64 = scmp.eq.s32.totalorder %s21, 1
      %p65 = por %p63, %p64
      %p67 = scmp.ne.s32.totalorder %s52, %s66
      %p68 = scmp.eq.s32.totalorder %s21, 0
      %p69 = por %p67, %p68
      %s70 = ssub.s32 %s15, %s22
      %p71 = scmp.eq.s32.totalorder %s70, 0
      %s73 = sadd.s32 %s72, 1
      %s74 = scalar_select %p71, %s72, %s73
      %p77 = pneg %p71
      %p78 = scmp.eq.s32.totalorder %s15, 1
      %p79 = por %p77, %p78
      %p80 = scmp.ne.s32.totalorder %s72, %s75
      %p81 = scmp.eq.s32.totalorder %s15, 0
      %p82 = por %p80, %p81
      %p83 = scmp.ne.s32.totalorder %s72, %s75
      %p84 = scmp.eq.s32.totalorder %s20, 1
      %p85 = por %p83, %p84
      %p86 = scmp.ne.s32.totalorder %s75, %s76
      %p87 = scmp.eq.s32.totalorder %s20, 0
      %p88 = por %p86, %p87
      %p89 = scmp.ne.s32.totalorder %s75, %s76
      %p90 = scmp.eq.s32.totalorder %s21, 1
      %p91 = por %p89, %p90
      %p93 = scmp.ne.s32.totalorder %s76, %s92
      %p94 = scmp.eq.s32.totalorder %s21, 0
      %p95 = por %p93, %p94
      %p96 = scmp.le.s32.totalorder 1, %s15
      %p97 = scmp.lt.s32.totalorder %s15, 3
      %p98 = pnand %p96, %p97
      %p99 = pneg %p98
      // Predicated region
      $region9: #{tpu_custom_call.1} parent=5 // pred_check
        _
      $region10: #{tpu_custom_call.1} parent=5 // pred_check_branch
        %101 = sbr.rel (%p98) target = $region12
      $region11: #{tpu_custom_call.1} parent=5 // pred_region
        %s102 = ssub.s32 %s15, 1
        // Predicated region
        $region13: #{tpu_custom_call.1} parent=11 // pred_check
          %p103 = pneg %p62
        $region14: #{tpu_custom_call.1} parent=11 // pred_check_branch
          %105 = sbr.rel (%p103) target = $region16
        $region15: #{tpu_custom_call.1} parent=11 // pred_region
          %s107 = ssub.s32 4096, 4096
          %108 = vsyncadd [#allocation6], %s107
          %s109 = sshll.u32 [#allocation5], 4
          %s110 = int_to_ptr.vmem [resolvable:$true] %s109
          %115 = dma.hbm_to_vmem [thread:$0]  %s1, 4096, %s110, [#allocation6], 64, 64, 4
        $region16: #{tpu_custom_call.1} parent=11 // pred_fallthru
          _
      $region12: #{tpu_custom_call.1} parent=5 // pred_fallthru
        _
      %p116 = scmp.lt.s32.totalorder %s15, 2
      // Predicated region
      $region17: #{tpu_custom_call.1} parent=5 // pred_check
        %p117 = pneg %p116
      $region18: #{tpu_custom_call.1} parent=5 // pred_check_branch
        %119 = sbr.rel (%p117) target = $region20
      $region19: #{tpu_custom_call.1} parent=5 // pred_region
        // Predicated region
        $region21: #{tpu_custom_call.1} parent=19 // pred_check
          %p120 = pneg %p35
        $region22: #{tpu_custom_call.1} parent=19 // pred_check_branch
          %122 = sbr.rel (%p120) target = $region24
        $region23: #{tpu_custom_call.1} parent=19 // pred_region
          %s123 = sand.u32 %s25, 1
          %s124 = scalar_lea.sflag [#allocation3], %s123
          %s125 = sand.u32 %s25, 1
          %s126 = smul.addr %s125, 128
          %s127 = scalar_lea.vmem [#allocation2], %s126
          %s128 = smul.u32 4, %s15
          %s130 = ssub.s32 2048, 2048
          %131 = vsyncadd %s124, %s130
          %s132 = smul.addr %s128, 4
          %s133 = smul.addr %s132, 128
          %s134 = scalar_lea.hbm %s0, %s133
          %s135 = sshll.u32 %s127, 4
          %s136 = int_to_ptr.vmem [resolvable:$true] %s135
          %141 = dma.hbm_to_vmem [thread:$0]  %s134, 2048, %s136, %s124, 512, 512, 32
        $region24: #{tpu_custom_call.1} parent=19 // pred_fallthru
          _
      $region20: #{tpu_custom_call.1} parent=5 // pred_fallthru
        _
      %p142 = scmp.le.s32.totalorder 1, %s15
      %p143 = scmp.lt.s32.totalorder %s15, 3
      %p144 = pnand %p142, %p143
      %p145 = pneg %p144
      // Predicated region
      $region25: #{tpu_custom_call.1} parent=5 // pred_check
        _
      $region26: #{tpu_custom_call.1} parent=5 // pred_check_branch
        %147 = sbr.rel (%p144) target = $region28
      $region27: #{tpu_custom_call.1} parent=5 // pred_region
        %s148 = ssub.s32 %s15, 1
        %s149 = sand.u32 %s28, 1
        %s150 = scalar_lea.sflag [#allocation3], %s149
        %s151 = sand.u32 %s28, 1
        %s152 = smul.addr %s151, 128
        %s153 = scalar_lea.vmem [#allocation2], %s152
        // Predicated region
        $region29: #{tpu_custom_call.1} parent=27 // pred_check
          %p154 = pneg %p41
        $region30: #{tpu_custom_call.1} parent=27 // pred_check_branch
          %156 = sbr.rel (%p154) target = $region32
        $region31: #{tpu_custom_call.1} parent=27 // pred_region
          %157 = dma.done %s150, 2048
        $region32: #{tpu_custom_call.1} parent=27 // pred_fallthru
          _
        // Predicated region
        $region33: #{tpu_custom_call.1} parent=27 // pred_check
          %p158 = pneg %p62
        $region34: #{tpu_custom_call.1} parent=27 // pred_check_branch
          %160 = sbr.rel (%p158) target = $region36
        $region35: #{tpu_custom_call.1} parent=27 // pred_region
          %161 = dma.done [#allocation6], 4096
        $region36: #{tpu_custom_call.1} parent=27 // pred_fallthru
          _
        %s162 = sand.u32 %s28, 1
        %s163 = scalar_lea.sflag [#allocation3], %s162
        %s164 = sand.u32 %s28, 1
        %s165 = smul.addr %s164, 128
        %s166 = scalar_lea.vmem [#allocation2], %s165
        %p167 = pneg %p41
        %p168 = pneg %p38
        %p169 = pneg %p62
        %p170 = pneg %p59
        %p171 = pneg %p88
        %p172 = pneg %p85
        %s173 = sand.u32 %s75, 1
        %s174 = scalar_lea.sflag [#allocation4], %s173
        %s175 = sand.u32 %s75, 1
        %s176 = smul.addr %s175, 32
        %s177 = scalar_lea.vmem [#allocation7], %s176
        %s178 = smul.u32 4, %s20
        %s179 = smul.u32 4, %s20
        %v181 = vld [vmem:[%s153] sm:$0xff]
        %v182 = vld [vmem:[%s153 + $0x8] sm:$0xff]
        %v183 = vld [vmem:[%s153 + $0x10] sm:$0xff]
        %v184 = vld [vmem:[%s153 + $0x18] sm:$0xff]
        %v185 = vld [vmem:[%s153 + $0x20] sm:$0xff]
        %v186 = vld [vmem:[%s153 + $0x28] sm:$0xff]
        %v187 = vld [vmem:[%s153 + $0x30] sm:$0xff]
        %v188 = vld [vmem:[%s153 + $0x38] sm:$0xff]
        %v189 = vld [vmem:[%s153 + $0x40] sm:$0xff]
        %v190 = vld [vmem:[%s153 + $0x48] sm:$0xff]
        %v191 = vld [vmem:[%s153 + $0x50] sm:$0xff]
        %v192 = vld [vmem:[%s153 + $0x58] sm:$0xff]
        %v193 = vld [vmem:[%s153 + $0x60] sm:$0xff]
        %v194 = vld [vmem:[%s153 + $0x68] sm:$0xff]
        %v195 = vld [vmem:[%s153 + $0x70] sm:$0xff]
        %v196 = vld [vmem:[%s153 + $0x78] sm:$0xff]
        %v197 = vmul.f32 %v181, %v181
        %v198 = vmul.f32 %v182, %v182
        %v199 = vmul.f32 %v183, %v183
        %v200 = vmul.f32 %v184, %v184
        %v201 = vmul.f32 %v185, %v185
        %v202 = vmul.f32 %v186, %v186
        %v203 = vmul.f32 %v187, %v187
        %v204 = vmul.f32 %v188, %v188
        %v205 = vmul.f32 %v189, %v189
        %v206 = vmul.f32 %v190, %v190
        %v207 = vmul.f32 %v191, %v191
        %v208 = vmul.f32 %v192, %v192
        %v209 = vmul.f32 %v193, %v193
        %v210 = vmul.f32 %v194, %v194
        %v211 = vmul.f32 %v195, %v195
        %v212 = vmul.f32 %v196, %v196
        %v213 = vadd.f32 %v197, %v198
        %v214 = vadd.f32 %v213, %v199
        %v215 = vadd.f32 %v214, %v200
        %216 = vadd.xlane.f32.xlu0 %v215
        %v217 = vpop.xlane.xlu0 %216
        %v218 = vadd.f32 %v201, %v202
        %v219 = vadd.f32 %v218, %v203
        %v220 = vadd.f32 %v219, %v204
        %221 = vadd.xlane.f32.xlu0 %v220
        %v222 = vpop.xlane.xlu0 %221
        %v223 = vadd.f32 %v205, %v206
        %v224 = vadd.f32 %v223, %v207
        %v225 = vadd.f32 %v224, %v208
        %226 = vadd.xlane.f32.xlu0 %v225
        %v227 = vpop.xlane.xlu0 %226
        %v228 = vadd.f32 %v209, %v210
        %v229 = vadd.f32 %v228, %v211
        %v230 = vadd.f32 %v229, %v212
        %231 = vadd.xlane.f32.xlu0 %v230
        %v232 = vpop.xlane.xlu0 %231
        %v233 = vmax.f32 %v217, 1e-24
        %v234 = vmax.f32 %v222, 1e-24
        %v235 = vmax.f32 %v227, 1e-24
        %v236 = vmax.f32 %v232, 1e-24
        %v237 = vrsqrt.pop %v233
        %v238 = vrsqrt.pop %v234
        %v239 = vrsqrt.pop %v235
        %v240 = vrsqrt.pop %v236
        %v241 = vpack.c.bf16 %v185, %v181
        %v242 = vpack.c.bf16 %v186, %v182
        %v243 = vpack.c.bf16 %v187, %v183
        %v244 = vpack.c.bf16 %v188, %v184
        %v245 = vpack.c.bf16 %v193, %v189
        %v246 = vpack.c.bf16 %v194, %v190
        %v247 = vpack.c.bf16 %v195, %v191
        %v248 = vpack.c.bf16 %v196, %v192
        %v249 = vld [vmem:[#allocation5] sm:$0xf]
        %v250 = vld [vmem:[#allocation5 + $0x4] sm:$0xf]
        %v251 = vld [vmem:[#allocation5 + $0x8] sm:$0xf]
        %v252 = vld [vmem:[#allocation5 + $0xc] sm:$0xf]
        %v253 = vld [vmem:[#allocation5 + $0x10] sm:$0xf]
        %v254 = vld [vmem:[#allocation5 + $0x14] sm:$0xf]
        %v255 = vld [vmem:[#allocation5 + $0x18] sm:$0xf]
        %v256 = vld [vmem:[#allocation5 + $0x1c] sm:$0xf]
        %v257 = vld [vmem:[#allocation5 + $0x20] sm:$0xf]
        %v258 = vld [vmem:[#allocation5 + $0x24] sm:$0xf]
        %v259 = vld [vmem:[#allocation5 + $0x28] sm:$0xf]
        %v260 = vld [vmem:[#allocation5 + $0x2c] sm:$0xf]
        %v261 = vld [vmem:[#allocation5 + $0x30] sm:$0xf]
        %v262 = vld [vmem:[#allocation5 + $0x34] sm:$0xf]
        %v263 = vld [vmem:[#allocation5 + $0x38] sm:$0xf]
        %v264 = vld [vmem:[#allocation5 + $0x3c] sm:$0xf]
        %v265 = vld [vmem:[#allocation5 + $0x40] sm:$0xf]
        %v266 = vld [vmem:[#allocation5 + $0x44] sm:$0xf]
        %v267 = vld [vmem:[#allocation5 + $0x48] sm:$0xf]
        %v268 = vld [vmem:[#allocation5 + $0x4c] sm:$0xf]
        %v269 = vld [vmem:[#allocation5 + $0x50] sm:$0xf]
        %v270 = vld [vmem:[#allocation5 + $0x54] sm:$0xf]
        %v271 = vld [vmem:[#allocation5 + $0x58] sm:$0xf]
        %v272 = vld [vmem:[#allocation5 + $0x5c] sm:$0xf]
        %v273 = vld [vmem:[#allocation5 + $0x60] sm:$0xf]
        %v274 = vld [vmem:[#allocation5 + $0x64] sm:$0xf]
        %v275 = vld [vmem:[#allocation5 + $0x68] sm:$0xf]
        %v276 = vld [vmem:[#allocation5 + $0x6c] sm:$0xf]
        %v277 = vld [vmem:[#allocation5 + $0x70] sm:$0xf]
        %v278 = vld [vmem:[#allocation5 + $0x74] sm:$0xf]
        %v279 = vld [vmem:[#allocation5 + $0x78] sm:$0xf]
        %v280 = vld [vmem:[#allocation5 + $0x7c] sm:$0xf]
        %v281 = vld [vmem:[#allocation5 + $0x80] sm:$0xf]
        %v282 = vld [vmem:[#allocation5 + $0x84] sm:$0xf]
        %v283 = vld [vmem:[#allocation5 + $0x88] sm:$0xf]
        %v284 = vld [vmem:[#allocation5 + $0x8c] sm:$0xf]
        %v285 = vld [vmem:[#allocation5 + $0x90] sm:$0xf]
        %v286 = vld [vmem:[#allocation5 + $0x94] sm:$0xf]
        %v287 = vld [vmem:[#allocation5 + $0x98] sm:$0xf]
        %v288 = vld [vmem:[#allocation5 + $0x9c] sm:$0xf]
        %v289 = vld [vmem:[#allocation5 + $0xa0] sm:$0xf]
        %v290 = vld [vmem:[#allocation5 + $0xa4] sm:$0xf]
        %v291 = vld [vmem:[#allocation5 + $0xa8] sm:$0xf]
        %v292 = vld [vmem:[#allocation5 + $0xac] sm:$0xf]
        %v293 = vld [vmem:[#allocation5 + $0xb0] sm:$0xf]
        %v294 = vld [vmem:[#allocation5 + $0xb4] sm:$0xf]
        %v295 = vld [vmem:[#allocation5 + $0xb8] sm:$0xf]
        %v296 = vld [vmem:[#allocation5 + $0xbc] sm:$0xf]
        %v297 = vld [vmem:[#allocation5 + $0xc0] sm:$0xf]
        %v298 = vld [vmem:[#allocation5 + $0xc4] sm:$0xf]
        %v299 = vld [vmem:[#allocation5 + $0xc8] sm:$0xf]
        %v300 = vld [vmem:[#allocation5 + $0xcc] sm:$0xf]
        %v301 = vld [vmem:[#allocation5 + $0xd0] sm:$0xf]
        %v302 = vld [vmem:[#allocation5 + $0xd4] sm:$0xf]
        %v303 = vld [vmem:[#allocation5 + $0xd8] sm:$0xf]
        %v304 = vld [vmem:[#allocation5 + $0xdc] sm:$0xf]
        %v305 = vld [vmem:[#allocation5 + $0xe0] sm:$0xf]
        %v306 = vld [vmem:[#allocation5 + $0xe4] sm:$0xf]
        %v307 = vld [vmem:[#allocation5 + $0xe8] sm:$0xf]
        %v308 = vld [vmem:[#allocation5 + $0xec] sm:$0xf]
        %v309 = vld [vmem:[#allocation5 + $0xf0] sm:$0xf]
        %v310 = vld [vmem:[#allocation5 + $0xf4] sm:$0xf]
        %v311 = vld [vmem:[#allocation5 + $0xf8] sm:$0xf]
        %v312 = vld [vmem:[#allocation5 + $0xfc] sm:$0xf]
        %v377 = vunpack.c.l.b16 %v249
        %v378 = vunpack.c.l.b16 %v250
        %v379 = vunpack.c.l.b16 %v251
        %v380 = vunpack.c.l.b16 %v252
        %v381 = vunpack.c.l.b16 %v253
        %v382 = vunpack.c.l.b16 %v254
        %v383 = vunpack.c.l.b16 %v255
        %v384 = vunpack.c.l.b16 %v256
        %v385 = vunpack.c.l.b16 %v257
        %v386 = vunpack.c.l.b16 %v258
        %v387 = vunpack.c.l.b16 %v259
        %v388 = vunpack.c.l.b16 %v260
        %v389 = vunpack.c.l.b16 %v261
        %v390 = vunpack.c.l.b16 %v262
        %v391 = vunpack.c.l.b16 %v263
        %v392 = vunpack.c.l.b16 %v264
        %v393 = vunpack.c.l.b16 %v265
        %v394 = vunpack.c.l.b16 %v266
        %v395 = vunpack.c.l.b16 %v267
        %v396 = vunpack.c.l.b16 %v268
        %v397 = vunpack.c.l.b16 %v269
        %v398 = vunpack.c.l.b16 %v270
        %v399 = vunpack.c.l.b16 %v271
        %v400 = vunpack.c.l.b16 %v272
        %v401 = vunpack.c.l.b16 %v273
        %v402 = vunpack.c.l.b16 %v274
        %v403 = vunpack.c.l.b16 %v275
        %v404 = vunpack.c.l.b16 %v276
        %v405 = vunpack.c.l.b16 %v277
        %v406 = vunpack.c.l.b16 %v278
        %v407 = vunpack.c.l.b16 %v279
        %v408 = vunpack.c.l.b16 %v280
        %v409 = vunpack.c.l.b16 %v281
        %v410 = vunpack.c.l.b16 %v282
        %v411 = vunpack.c.l.b16 %v283
        %v412 = vunpack.c.l.b16 %v284
        %v413 = vunpack.c.l.b16 %v285
        %v414 = vunpack.c.l.b16 %v286
        %v415 = vunpack.c.l.b16 %v287
        %v416 = vunpack.c.l.b16 %v288
        %v417 = vunpack.c.l.b16 %v289
        %v418 = vunpack.c.l.b16 %v290
        %v419 = vunpack.c.l.b16 %v291
        %v420 = vunpack.c.l.b16 %v292
        %v421 = vunpack.c.l.b16 %v293
        %v422 = vunpack.c.l.b16 %v294
        %v423 = vunpack.c.l.b16 %v295
        %v424 = vunpack.c.l.b16 %v296
        %v425 = vunpack.c.l.b16 %v297
        %v426 = vunpack.c.l.b16 %v298
        %v427 = vunpack.c.l.b16 %v299
        %v428 = vunpack.c.l.b16 %v300
        %v429 = vunpack.c.l.b16 %v301
        %v430 = vunpack.c.l.b16 %v302
        %v431 = vunpack.c.l.b16 %v303
        %v432 = vunpack.c.l.b16 %v304
        %v433 = vunpack.c.l.b16 %v305
        %v434 = vunpack.c.l.b16 %v306
        %v435 = vunpack.c.l.b16 %v307
        %v436 = vunpack.c.l.b16 %v308
        %v437 = vunpack.c.l.b16 %v309
        %v438 = vunpack.c.l.b16 %v310
        %v439 = vunpack.c.l.b16 %v311
        %v440 = vunpack.c.l.b16 %v312
        %v441 = vpack.c.b16 %v378, %v377
        %v442 = vpack.c.b16 %v380, %v379
        %v443 = vpack.c.b16 %v382, %v381
        %v444 = vpack.c.b16 %v384, %v383
        %v445 = vpack.c.b16 %v386, %v385
        %v446 = vpack.c.b16 %v388, %v387
        %v447 = vpack.c.b16 %v390, %v389
        %v448 = vpack.c.b16 %v392, %v391
        %v449 = vpack.c.b16 %v394, %v393
        %v450 = vpack.c.b16 %v396, %v395
        %v451 = vpack.c.b16 %v398, %v397
        %v452 = vpack.c.b16 %v400, %v399
        %v453 = vpack.c.b16 %v402, %v401
        %v454 = vpack.c.b16 %v404, %v403
        %v455 = vpack.c.b16 %v406, %v405
        %v456 = vpack.c.b16 %v408, %v407
        %v457 = vpack.c.b16 %v410, %v409
        %v458 = vpack.c.b16 %v412, %v411
        %v459 = vpack.c.b16 %v414, %v413
        %v460 = vpack.c.b16 %v416, %v415
        %v461 = vpack.c.b16 %v418, %v417
        %v462 = vpack.c.b16 %v420, %v419
        %v463 = vpack.c.b16 %v422, %v421
        %v464 = vpack.c.b16 %v424, %v423
        %v465 = vpack.c.b16 %v426, %v425
        %v466 = vpack.c.b16 %v428, %v427
        %v467 = vpack.c.b16 %v430, %v429
        %v468 = vpack.c.b16 %v432, %v431
        %v469 = vpack.c.b16 %v434, %v433
        %v470 = vpack.c.b16 %v436, %v435
        %v471 = vpack.c.b16 %v438, %v437
        %v472 = vpack.c.b16 %v440, %v439
        %505 = vmatprep.subr.bf16.mxu0 0
        %506 = vmatpush1.bf16.msra.mxu0 %v441
        %507 = vmatprep.subr.bf16.mxu0 0
        %508 = vmatpush1.bf16.msra.mxu0 %v442
        %509 = vmatprep.subr.bf16.mxu0 0
        %510 = vmatpush1.bf16.msra.mxu0 %v443
        %511 = vmatprep.subr.bf16.mxu0 0
        %512 = vmatpush1.bf16.msra.mxu0 %v444
        %513 = vmatprep.subr.bf16.mxu0 0
        %514 = vmatpush1.bf16.msra.mxu0 %v445
        %515 = vmatprep.subr.bf16.mxu0 0
        %516 = vmatpush1.bf16.msra.mxu0 %v446
        %517 = vmatprep.subr.bf16.mxu0 0
        %518 = vmatpush1.bf16.msra.mxu0 %v447
        %519 = vmatprep.subr.bf16.mxu0 0
        %520 = vmatpush1.bf16.msra.mxu0 %v448
        %521 = vmatprep.subr.bf16.mxu0 0
        %522 = vmatpush1.bf16.msra.mxu0 %v449
        %523 = vmatprep.subr.bf16.mxu0 0
        %524 = vmatpush1.bf16.msra.mxu0 %v450
        %525 = vmatprep.subr.bf16.mxu0 0
        %526 = vmatpush1.bf16.msra.mxu0 %v451
        %527 = vmatprep.subr.bf16.mxu0 0
        %528 = vmatpush1.bf16.msra.mxu0 %v452
        %529 = vmatprep.subr.bf16.mxu0 0
        %530 = vmatpush1.bf16.msra.mxu0 %v453
        %531 = vmatprep.subr.bf16.mxu0 0
        %532 = vmatpush1.bf16.msra.mxu0 %v454
        %533 = vmatprep.subr.bf16.mxu0 0
        %534 = vmatpush1.bf16.msra.mxu0 %v455
        %535 = vmatprep.subr.bf16.mxu0 0
        %536 = vmatpush1.bf16.msra.mxu0 %v456
        %537 = vmatprep.mubr.bf16.mxu0 %v242
        %538 = vmatmul.mubr.bf16.gmra.mrb[0].mxu0 %v241
        %v539 = vpop.f32.mrb[0].mxu0
        %v540 = vadd.f32 0.0, %v539
        %v541 = vpop.f32.mrb[0].mxu0
        %v542 = vpop.f32.mrb[0].mxu0
        %v543 = vadd.f32 0.0, %v542
        %v544 = vpop.f32.mrb[0].mxu0
        %545 = vmatprep.mubr.bf16.mxu0 %v246
        %546 = vmatmul.mubr.bf16.gmra.mrb[0].mxu0 %v245
        %v547 = vpop.f32.mrb[0].mxu0
        %v548 = vadd.f32 0.0, %v547
        %v549 = vpop.f32.mrb[0].mxu0
        %v550 = vpop.f32.mrb[0].mxu0
        %v551 = vadd.f32 0.0, %v550
        %v552 = vpop.f32.mrb[0].mxu0
        %553 = vdwg.mxu0
        %554 = vmatprep.subr.bf16.mxu0 0
        %555 = vmatpush1.bf16.msra.mxu0 %v457
        %556 = vmatprep.subr.bf16.mxu0 0
        %557 = vmatpush1.bf16.msra.mxu0 %v458
        %558 = vmatprep.subr.bf16.mxu0 0
        %559 = vmatpush1.bf16.msra.mxu0 %v459
        %560 = vmatprep.subr.bf16.mxu0 0
        %561 = vmatpush1.bf16.msra.mxu0 %v460
        %562 = vmatprep.subr.bf16.mxu0 0
        %563 = vmatpush1.bf16.msra.mxu0 %v461
        %564 = vmatprep.subr.bf16.mxu0 0
        %565 = vmatpush1.bf16.msra.mxu0 %v462
        %566 = vmatprep.subr.bf16.mxu0 0
        %567 = vmatpush1.bf16.msra.mxu0 %v463
        %568 = vmatprep.subr.bf16.mxu0 0
        %569 = vmatpush1.bf16.msra.mxu0 %v464
        %570 = vmatprep.subr.bf16.mxu0 0
        %571 = vmatpush1.bf16.msra.mxu0 %v465
        %572 = vmatprep.subr.bf16.mxu0 0
        %573 = vmatpush1.bf16.msra.mxu0 %v466
        %574 = vmatprep.subr.bf16.mxu0 0
        %575 = vmatpush1.bf16.msra.mxu0 %v467
        %576 = vmatprep.subr.bf16.mxu0 0
        %577 = vmatpush1.bf16.msra.mxu0 %v468
        %578 = vmatprep.subr.bf16.mxu0 0
        %579 = vmatpush1.bf16.msra.mxu0 %v469
        %580 = vmatprep.subr.bf16.mxu0 0
        %581 = vmatpush1.bf16.msra.mxu0 %v470
        %582 = vmatprep.subr.bf16.mxu0 0
        %583 = vmatpush1.bf16.msra.mxu0 %v471
        %584 = vmatprep.subr.bf16.mxu0 0
        %585 = vmatpush1.bf16.msra.mxu0 %v472
        %586 = vmatprep.mubr.bf16.mxu0 %v244
        %587 = vmatmul.mubr.bf16.gmra.mrb[0].mxu0 %v243
        %v588 = vpop.f32.mrb[0].mxu0
        %v589 = vadd.f32 %v540, %v588
        %v590 = vpop.f32.mrb[0].mxu0
        %v591 = vpop.f32.mrb[0].mxu0
        %v592 = vadd.f32 %v543, %v591
        %v593 = vpop.f32.mrb[0].mxu0
        %594 = vmatprep.mubr.bf16.mxu0 %v248
        %595 = vmatmul.mubr.bf16.gmra.mrb[0].mxu0 %v247
        %v596 = vpop.f32.mrb[0].mxu0
        %v597 = vadd.f32 %v548, %v596
        %v598 = vpop.f32.mrb[0].mxu0
        %v599 = vpop.f32.mrb[0].mxu0
        %v600 = vadd.f32 %v551, %v599
        %v601 = vpop.f32.mrb[0].mxu0
        %602 = vdwg.mxu0
        %v603 = vmul.f32 %v589, %v237
        %v604 = vmul.f32 %v592, %v238
        %v605 = vmul.f32 %v597, %v239
        %v606 = vmul.f32 %v600, %v240
        %607 = vst [vmem:[%s177] sm:$0xff] %v603
        %608 = vst [vmem:[%s177 + $0x8] sm:$0xff] %v604
        %609 = vst [vmem:[%s177 + $0x10] sm:$0xff] %v605
        %610 = vst [vmem:[%s177 + $0x18] sm:$0xff] %v606
        %s611 = sand.u32 %s75, 1
        %s612 = scalar_lea.sflag [#allocation4], %s611
        %s613 = sand.u32 %s75, 1
        %s614 = smul.addr %s613, 32
        %s615 = scalar_lea.vmem [#allocation7], %s614
        // Predicated region
        $region37: #{tpu_custom_call.1} parent=27 // pred_check
          %p616 = pneg %p85
        $region38: #{tpu_custom_call.1} parent=27 // pred_check_branch
          %618 = sbr.rel (%p616) target = $region40
        $region39: #{tpu_custom_call.1} parent=27 // pred_region
          %s619 = smul.u32 4, %s20
          %s621 = ssub.s32 512, 512
          %622 = vsyncadd %s612, %s621
          %s623 = smul.addr %s619, 128
          %s624 = scalar_lea.hbm %s2, %s623
          %s625 = sshll.u32 %s615, 4
          %s626 = int_to_ptr.vmem [resolvable:$true] %s625
          %631 = dma.vmem_to_hbm [thread:$0]  %s626, 512, %s624, %s612, 128, 128, 8
        $region40: #{tpu_custom_call.1} parent=27 // pred_fallthru
          _
      $region28: #{tpu_custom_call.1} parent=5 // pred_fallthru
        _
      %p632 = scmp.le.s32.totalorder 2, %s15
      // Predicated region
      $region41: #{tpu_custom_call.1} parent=5 // pred_check
        %p633 = pneg %p632
      $region42: #{tpu_custom_call.1} parent=5 // pred_check_branch
        %635 = sbr.rel (%p633) target = $region44
      $region43: #{tpu_custom_call.1} parent=5 // pred_region
        %s636 = ssub.s32 %s15, 2
        // Predicated region
        $region45: #{tpu_custom_call.1} parent=43 // pred_check
          %p637 = pneg %p91
        $region46: #{tpu_custom_call.1} parent=43 // pred_check_branch
          %639 = sbr.rel (%p637) target = $region48
        $region47: #{tpu_custom_call.1} parent=43 // pred_region
          %s640 = sand.u32 %s76, 1
          %s641 = scalar_lea.sflag [#allocation4], %s640
          %s642 = sand.u32 %s76, 1
          %s643 = smul.addr %s642, 32
          %s644 = scalar_lea.vmem [#allocation7], %s643
          %645 = dma.done %s641, 512
        $region48: #{tpu_custom_call.1} parent=43 // pred_fallthru
          _
      $region44: #{tpu_custom_call.1} parent=5 // pred_fallthru
        _
    $region6: #{tpu_custom_call.1} parent=1 // loop_footer
      %s19 = sadd.s32 1, %s15
    $region7: #{tpu_custom_call.1} parent=1 // loop_footer_branch
      %14 = sbr.rel target = $region3
    $region8: #{tpu_custom_call.1} parent=1 // loop_exit
      _
    %646 = vsyncpa [#allocation3], 1
    %s647 = scalar_lea.sflag [#allocation3], 1
    %648 = vsyncpa %s647, 1
    %649 = vsyncpa [#allocation6], 1
    %650 = vsyncpa [#allocation4], 1
    %s651 = scalar_lea.sflag [#allocation4], 1
    %652 = vsyncpa %s651, 1

// kernel: tpu_custom_call.1
$region0: #{tpu_custom_call.1}
  #allocation0 [shape = 'u32[]', space=smem, size = 0x4, offset = 0x4, fixed_abs, tag = 'smem constant byte address 0x4 - core index']
  #allocation1 [shape = 'u32[144,128]{1,0:T(1,128)}', space=vmem, size = 0x12000, scoped, tag = 'internal scratch']
  %s0 = inlined_call_operand.hbm [shape: f32[64,512], index: 0, kind: input, shape index: {}]
  %s1 = inlined_call_operand.hbm [shape: bf16[512,128], index: 1, kind: input, shape index: {}]
  %s2 = inlined_call_operand.hbm [shape: f32[64,128], index: 2, kind: output, shape index: {}]
  %s3 = sld [smem:[#allocation0]]
  $region49: #{tpu_custom_call.1} parent=0
    _
  %s5 = ssub.s32 1, %s3
  %s6 = scalar_select 0, %s5, %s3
  $region1: #{tpu_custom_call.1} parent=0
    #allocation2 [shape = 'u8[131072]{0}', space=vmem, size = 0x20000, scoped, tag = 'input window, operand 0']
    #allocation3 [shape = 's32[2]{0}', space=sflag, size = 0x8, scoped, tag = 'scoped memory for tpu_custom_call.1']
    #allocation4 [shape = 's32[2]{0}', space=sflag, size = 0x8, scoped, tag = 'scoped memory for tpu_custom_call.1']
    #allocation5 [shape = 'u8[131072]{0}', space=vmem, size = 0x20000, scoped, tag = 'input window, operand 1, single buffered']
    #allocation6 [shape = 's32[1]{0}', space=sflag, size = 0x4, scoped, tag = 'scoped memory for tpu_custom_call.1']
    #allocation7 [shape = 'u8[32768]{0}', space=vmem, size = 0x8000, scoped, tag = 'output window, operand 0']
    %7 = vsyncpa [#allocation3], 0
    %s8 = scalar_lea.sflag [#allocation3], 1
    %9 = vsyncpa %s8, 0
    %10 = vsyncpa [#allocation6], 0
    %11 = vsyncpa [#allocation4], 0
    %s12 = scalar_lea.sflag [#allocation4], 1
    %13 = vsyncpa %s12, 0
    loop: start=0, step=1, limit=4
    $region2: #{tpu_custom_call.1} parent=1 // loop_pre_header
      _
    $region3: #{tpu_custom_call.1} parent=1 // loop_header
      %s15 = sphi 0, %s19
      %p16 = scmp.ge.s32.totalorder %s15, 4
      %s25 = sphi 0, %s27
      %s28 = sphi 0, %s25
      %s29 = sphi 0, %s28
      %s45 = sphi 0, %s29
      %s49 = sphi 0, %s49
      %s51 = sphi 0, %s49
      %s52 = sphi 0, %s51
      %s66 = sphi 0, %s52
      %s72 = sphi 0, %s74
      %s75 = sphi 0, %s72
      %s76 = sphi 0, %s75
      %s92 = sphi 0, %s76
    $region4: #{tpu_custom_call.1} parent=1 // loop_header_branch
      %18 = sbr.rel (%p16) target = $region8
    $region5: #{tpu_custom_call.1} parent=1 // loop_body
      %s20 = ssub.s32 %s15, 1
      %s21 = ssub.s32 %s15, 2
      %s22 = sadd.s32 %s15, 1
      %s23 = ssub.s32 %s15, %s22
      %p24 = scmp.eq.s32.totalorder %s23, 0
      %s26 = sadd.s32 %s25, 1
      %s27 = scalar_select %p24, %s25, %s26
      %p30 = pneg %p24
      %p31 = scmp.eq.s32.totalorder %s15, 1
      %p32 = por %p30, %p31
      %p33 = scmp.ne.s32.totalorder %s25, %s28
      %p34 = scmp.eq.s32.totalorder %s15, 0
      %p35 = por %p33, %p34
      %p36 = scmp.ne.s32.totalorder %s25, %s28
      %p37 = scmp.eq.s32.totalorder %s20, 1
      %p38 = por %p36, %p37
      %p39 = scmp.ne.s32.totalorder %s28, %s29
      %p40 = scmp.eq.s32.totalorder %s20, 0
      %p41 = por %p39, %p40
      %p42 = scmp.ne.s32.totalorder %s28, %s29
      %p43 = scmp.eq.s32.totalorder %s21, 1
      %p44 = por %p42, %p43
      %p46 = scmp.ne.s32.totalorder %s29, %s45
      %p47 = scmp.eq.s32.totalorder %s21, 0
      %p48 = por %p46, %p47
      %s50 = sadd.s32 %s49, 1
      %p53 = scmp.eq.s32.totalorder %s15, 1
      %p54 = scmp.ne.s32.totalorder %s49, %s51
      %p55 = scmp.eq.s32.totalorder %s15, 0
      %p56 = por %p54, %p55
      %p57 = scmp.ne.s32.totalorder %s49, %s51
      %p58 = scmp.eq.s32.totalorder %s20, 1
      %p59 = por %p57, %p58
      %p60 = scmp.ne.s32.totalorder %s51, %s52
      %p61 = scmp.eq.s32.totalorder %s20, 0
      %p62 = por %p60, %p61
      %p63 = scmp.ne.s32.totalorder %s51, %s52
      %p64 = scmp.eq.s32.totalorder %s21, 1
      %p65 = por %p63, %p64
      %p67 = scmp.ne.s32.totalorder %s52, %s66
      %p68 = scmp.eq.s32.totalorder %s21, 0
      %p69 = por %p67, %p68
      %s70 = ssub.s32 %s15, %s22
      %p71 = scmp.eq.s32.totalorder %s70, 0
      %s73 = sadd.s32 %s72, 1
      %s74 = scalar_select %p71, %s72, %s73
      %p77 = pneg %p71
      %p78 = scmp.eq.s32.totalorder %s15, 1
      %p79 = por %p77, %p78
      %p80 = scmp.ne.s32.totalorder %s72, %s75
      %p81 = scmp.eq.s32.totalorder %s15, 0
      %p82 = por %p80, %p81
      %p83 = scmp.ne.s32.totalorder %s72, %s75
      %p84 = scmp.eq.s32.totalorder %s20, 1
      %p85 = por %p83, %p84
      %p86 = scmp.ne.s32.totalorder %s75, %s76
      %p87 = scmp.eq.s32.totalorder %s20, 0
      %p88 = por %p86, %p87
      %p89 = scmp.ne.s32.totalorder %s75, %s76
      %p90 = scmp.eq.s32.totalorder %s21, 1
      %p91 = por %p89, %p90
      %p93 = scmp.ne.s32.totalorder %s76, %s92
      %p94 = scmp.eq.s32.totalorder %s21, 0
      %p95 = por %p93, %p94
      %p96 = scmp.le.s32.totalorder 1, %s15
      %p97 = scmp.lt.s32.totalorder %s15, 3
      %p98 = pnand %p96, %p97
      %p99 = pneg %p98
      // Predicated region
      $region9: #{tpu_custom_call.1} parent=5 // pred_check
        _
      $region10: #{tpu_custom_call.1} parent=5 // pred_check_branch
        %101 = sbr.rel (%p98) target = $region12
      $region11: #{tpu_custom_call.1} parent=5 // pred_region
        %s102 = ssub.s32 %s15, 1
        // Predicated region
        $region13: #{tpu_custom_call.1} parent=11 // pred_check
          %p103 = pneg %p62
        $region14: #{tpu_custom_call.1} parent=11 // pred_check_branch
          %105 = sbr.rel (%p103) target = $region16
        $region15: #{tpu_custom_call.1} parent=11 // pred_region
          %s107 = ssub.s32 4096, 4096
          %108 = vsyncadd [#allocation6], %s107
          %s109 = sshll.u32 [#allocation5], 4
          %s110 = int_to_ptr.vmem [resolvable:$true] %s109
          %115 = dma.hbm_to_vmem [thread:$0]  %s1, 4096, %s110, [#allocation6], 64, 64, 4
        $region16: #{tpu_custom_call.1} parent=11 // pred_fallthru
          _
      $region12: #{tpu_custom_call.1} parent=5 // pred_fallthru
        _
      %p116 = scmp.lt.s32.totalorder %s15, 2
      // Predicated region
      $region17: #{tpu_custom_call.1} parent=5 // pred_check
        %p117 = pneg %p116
      $region18: #{tpu_custom_call.1} parent=5 // pred_check_branch
        %119 = sbr.rel (%p117) target = $region20
      $region19: #{tpu_custom_call.1} parent=5 // pred_region
        // Predicated region
        $region21: #{tpu_custom_call.1} parent=19 // pred_check
          %p120 = pneg %p35
        $region22: #{tpu_custom_call.1} parent=19 // pred_check_branch
          %122 = sbr.rel (%p120) target = $region24
        $region23: #{tpu_custom_call.1} parent=19 // pred_region
          %s123 = sand.u32 %s25, 1
          %s124 = scalar_lea.sflag [#allocation3], %s123
          %s125 = sand.u32 %s25, 1
          %s126 = smul.addr %s125, 128
          %s127 = scalar_lea.vmem [#allocation2], %s126
          %s128 = smul.u32 4, %s15
          %s130 = ssub.s32 2048, 2048
          %131 = vsyncadd %s124, %s130
          %s132 = smul.addr %s128, 4
          %s133 = smul.addr %s132, 128
          %s134 = scalar_lea.hbm %s0, %s133
          %s135 = sshll.u32 %s127, 4
          %s136 = int_to_ptr.vmem [resolvable:$true] %s135
          %141 = dma.hbm_to_vmem [thread:$0]  %s134, 2048, %s136, %s124, 512, 512, 32
        $region24: #{tpu_custom_call.1} parent=19 // pred_fallthru
          _
      $region20: #{tpu_custom_call.1} parent=5 // pred_fallthru
        _
      %p142 = scmp.le.s32.totalorder 1, %s15
      %p143 = scmp.lt.s32.totalorder %s15, 3
      %p144 = pnand %p142, %p143
      %p145 = pneg %p144
      // Predicated region
      $region25: #{tpu_custom_call.1} parent=5 // pred_check
        _
      $region26: #{tpu_custom_call.1} parent=5 // pred_check_branch
        %147 = sbr.rel (%p144) target = $region28
      $region27: #{tpu_custom_call.1} parent=5 // pred_region
        %s148 = ssub.s32 %s15, 1
        %s149 = sand.u32 %s28, 1
        %s150 = scalar_lea.sflag [#allocation3], %s149
        %s151 = sand.u32 %s28, 1
        %s152 = smul.addr %s151, 128
        %s153 = scalar_lea.vmem [#allocation2], %s152
        // Predicated region
        $region29: #{tpu_custom_call.1} parent=27 // pred_check
          %p154 = pneg %p41
        $region30: #{tpu_custom_call.1} parent=27 // pred_check_branch
          %156 = sbr.rel (%p154) target = $region32
        $region31: #{tpu_custom_call.1} parent=27 // pred_region
          %157 = dma.done %s150, 2048
        $region32: #{tpu_custom_call.1} parent=27 // pred_fallthru
          _
        // Predicated region
        $region33: #{tpu_custom_call.1} parent=27 // pred_check
          %p158 = pneg %p62
        $region34: #{tpu_custom_call.1} parent=27 // pred_check_branch
          %160 = sbr.rel (%p158) target = $region36
        $region35: #{tpu_custom_call.1} parent=27 // pred_region
          %161 = dma.done [#allocation6], 4096
        $region36: #{tpu_custom_call.1} parent=27 // pred_fallthru
          _
        %s162 = sand.u32 %s28, 1
        %s163 = scalar_lea.sflag [#allocation3], %s162
        %s164 = sand.u32 %s28, 1
        %s165 = smul.addr %s164, 128
        %s166 = scalar_lea.vmem [#allocation2], %s165
        %p167 = pneg %p41
        %p168 = pneg %p38
        %p169 = pneg %p62
        %p170 = pneg %p59
        %p171 = pneg %p88
        %p172 = pneg %p85
        %s173 = sand.u32 %s75, 1
        %s174 = scalar_lea.sflag [#allocation4], %s173
        %s175 = sand.u32 %s75, 1
        %s176 = smul.addr %s175, 32
        %s177 = scalar_lea.vmem [#allocation7], %s176
        %s178 = smul.u32 4, %s20
        %s179 = smul.u32 4, %s20
        %v181 = vld [vmem:[%s153] sm:$0xff]
        %v182 = vld [vmem:[%s153 + $0x8] sm:$0xff]
        %v183 = vld [vmem:[%s153 + $0x10] sm:$0xff]
        %v184 = vld [vmem:[%s153 + $0x18] sm:$0xff]
        %v185 = vld [vmem:[%s153 + $0x20] sm:$0xff]
        %v186 = vld [vmem:[%s153 + $0x28] sm:$0xff]
        %v187 = vld [vmem:[%s153 + $0x30] sm:$0xff]
        %v188 = vld [vmem:[%s153 + $0x38] sm:$0xff]
        %v189 = vld [vmem:[%s153 + $0x40] sm:$0xff]
        %v190 = vld [vmem:[%s153 + $0x48] sm:$0xff]
        %v191 = vld [vmem:[%s153 + $0x50] sm:$0xff]
        %v192 = vld [vmem:[%s153 + $0x58] sm:$0xff]
        %v193 = vld [vmem:[%s153 + $0x60] sm:$0xff]
        %v194 = vld [vmem:[%s153 + $0x68] sm:$0xff]
        %v195 = vld [vmem:[%s153 + $0x70] sm:$0xff]
        %v196 = vld [vmem:[%s153 + $0x78] sm:$0xff]
        %v197 = vmul.f32 %v181, %v181
        %v198 = vmul.f32 %v182, %v182
        %v199 = vmul.f32 %v183, %v183
        %v200 = vmul.f32 %v184, %v184
        %v201 = vmul.f32 %v185, %v185
        %v202 = vmul.f32 %v186, %v186
        %v203 = vmul.f32 %v187, %v187
        %v204 = vmul.f32 %v188, %v188
        %v205 = vmul.f32 %v189, %v189
        %v206 = vmul.f32 %v190, %v190
        %v207 = vmul.f32 %v191, %v191
        %v208 = vmul.f32 %v192, %v192
        %v209 = vmul.f32 %v193, %v193
        %v210 = vmul.f32 %v194, %v194
        %v211 = vmul.f32 %v195, %v195
        %v212 = vmul.f32 %v196, %v196
        %v213 = vadd.f32 %v197, %v198
        %v214 = vadd.f32 %v213, %v199
        %v215 = vadd.f32 %v214, %v200
        %216 = vadd.xlane.f32.xlu0 %v215
        %v217 = vpop.xlane.xlu0 %216
        %v218 = vadd.f32 %v201, %v202
        %v219 = vadd.f32 %v218, %v203
        %v220 = vadd.f32 %v219, %v204
        %221 = vadd.xlane.f32.xlu0 %v220
        %v222 = vpop.xlane.xlu0 %221
        %v223 = vadd.f32 %v205, %v206
        %v224 = vadd.f32 %v223, %v207
        %v225 = vadd.f32 %v224, %v208
        %226 = vadd.xlane.f32.xlu0 %v225
        %v227 = vpop.xlane.xlu0 %226
        %v228 = vadd.f32 %v209, %v210
        %v229 = vadd.f32 %v228, %v211
        %v230 = vadd.f32 %v229, %v212
        %231 = vadd.xlane.f32.xlu0 %v230
        %v232 = vpop.xlane.xlu0 %231
        %v233 = vmax.f32 %v217, 1e-24
        %v234 = vmax.f32 %v222, 1e-24
        %v235 = vmax.f32 %v227, 1e-24
        %v236 = vmax.f32 %v232, 1e-24
        %v237 = vrsqrt.pop %v233
        %v238 = vrsqrt.pop %v234
        %v239 = vrsqrt.pop %v235
        %v240 = vrsqrt.pop %v236
        %v241 = vpack.c.bf16 %v185, %v181
        %v242 = vpack.c.bf16 %v186, %v182
        %v243 = vpack.c.bf16 %v187, %v183
        %v244 = vpack.c.bf16 %v188, %v184
        %v245 = vpack.c.bf16 %v193, %v189
        %v246 = vpack.c.bf16 %v194, %v190
        %v247 = vpack.c.bf16 %v195, %v191
        %v248 = vpack.c.bf16 %v196, %v192
        %v249 = vld [vmem:[#allocation5] sm:$0xf]
        %v250 = vld [vmem:[#allocation5 + $0x4] sm:$0xf]
        %v251 = vld [vmem:[#allocation5 + $0x8] sm:$0xf]
        %v252 = vld [vmem:[#allocation5 + $0xc] sm:$0xf]
        %v253 = vld [vmem:[#allocation5 + $0x10] sm:$0xf]
        %v254 = vld [vmem:[#allocation5 + $0x14] sm:$0xf]
        %v255 = vld [vmem:[#allocation5 + $0x18] sm:$0xf]
        %v256 = vld [vmem:[#allocation5 + $0x1c] sm:$0xf]
        %v257 = vld [vmem:[#allocation5 + $0x20] sm:$0xf]
        %v258 = vld [vmem:[#allocation5 + $0x24] sm:$0xf]
        %v259 = vld [vmem:[#allocation5 + $0x28] sm:$0xf]
        %v260 = vld [vmem:[#allocation5 + $0x2c] sm:$0xf]
        %v261 = vld [vmem:[#allocation5 + $0x30] sm:$0xf]
        %v262 = vld [vmem:[#allocation5 + $0x34] sm:$0xf]
        %v263 = vld [vmem:[#allocation5 + $0x38] sm:$0xf]
        %v264 = vld [vmem:[#allocation5 + $0x3c] sm:$0xf]
        %v265 = vld [vmem:[#allocation5 + $0x40] sm:$0xf]
        %v266 = vld [vmem:[#allocation5 + $0x44] sm:$0xf]
        %v267 = vld [vmem:[#allocation5 + $0x48] sm:$0xf]
        %v268 = vld [vmem:[#allocation5 + $0x4c] sm:$0xf]
        %v269 = vld [vmem:[#allocation5 + $0x50] sm:$0xf]
        %v270 = vld [vmem:[#allocation5 + $0x54] sm:$0xf]
        %v271 = vld [vmem:[#allocation5 + $0x58] sm:$0xf]
        %v272 = vld [vmem:[#allocation5 + $0x5c] sm:$0xf]
        %v273 = vld [vmem:[#allocation5 + $0x60] sm:$0xf]
        %v274 = vld [vmem:[#allocation5 + $0x64] sm:$0xf]
        %v275 = vld [vmem:[#allocation5 + $0x68] sm:$0xf]
        %v276 = vld [vmem:[#allocation5 + $0x6c] sm:$0xf]
        %v277 = vld [vmem:[#allocation5 + $0x70] sm:$0xf]
        %v278 = vld [vmem:[#allocation5 + $0x74] sm:$0xf]
        %v279 = vld [vmem:[#allocation5 + $0x78] sm:$0xf]
        %v280 = vld [vmem:[#allocation5 + $0x7c] sm:$0xf]
        %v281 = vld [vmem:[#allocation5 + $0x80] sm:$0xf]
        %v282 = vld [vmem:[#allocation5 + $0x84] sm:$0xf]
        %v283 = vld [vmem:[#allocation5 + $0x88] sm:$0xf]
        %v284 = vld [vmem:[#allocation5 + $0x8c] sm:$0xf]
        %v285 = vld [vmem:[#allocation5 + $0x90] sm:$0xf]
        %v286 = vld [vmem:[#allocation5 + $0x94] sm:$0xf]
        %v287 = vld [vmem:[#allocation5 + $0x98] sm:$0xf]
        %v288 = vld [vmem:[#allocation5 + $0x9c] sm:$0xf]
        %v289 = vld [vmem:[#allocation5 + $0xa0] sm:$0xf]
        %v290 = vld [vmem:[#allocation5 + $0xa4] sm:$0xf]
        %v291 = vld [vmem:[#allocation5 + $0xa8] sm:$0xf]
        %v292 = vld [vmem:[#allocation5 + $0xac] sm:$0xf]
        %v293 = vld [vmem:[#allocation5 + $0xb0] sm:$0xf]
        %v294 = vld [vmem:[#allocation5 + $0xb4] sm:$0xf]
        %v295 = vld [vmem:[#allocation5 + $0xb8] sm:$0xf]
        %v296 = vld [vmem:[#allocation5 + $0xbc] sm:$0xf]
        %v297 = vld [vmem:[#allocation5 + $0xc0] sm:$0xf]
        %v298 = vld [vmem:[#allocation5 + $0xc4] sm:$0xf]
        %v299 = vld [vmem:[#allocation5 + $0xc8] sm:$0xf]
        %v300 = vld [vmem:[#allocation5 + $0xcc] sm:$0xf]
        %v301 = vld [vmem:[#allocation5 + $0xd0] sm:$0xf]
        %v302 = vld [vmem:[#allocation5 + $0xd4] sm:$0xf]
        %v303 = vld [vmem:[#allocation5 + $0xd8] sm:$0xf]
        %v304 = vld [vmem:[#allocation5 + $0xdc] sm:$0xf]
        %v305 = vld [vmem:[#allocation5 + $0xe0] sm:$0xf]
        %v306 = vld [vmem:[#allocation5 + $0xe4] sm:$0xf]
        %v307 = vld [vmem:[#allocation5 + $0xe8] sm:$0xf]
        %v308 = vld [vmem:[#allocation5 + $0xec] sm:$0xf]
        %v309 = vld [vmem:[#allocation5 + $0xf0] sm:$0xf]
        %v310 = vld [vmem:[#allocation5 + $0xf4] sm:$0xf]
        %v311 = vld [vmem:[#allocation5 + $0xf8] sm:$0xf]
        %v312 = vld [vmem:[#allocation5 + $0xfc] sm:$0xf]
        %v377 = vunpack.c.l.b16 %v249
        %v378 = vunpack.c.l.b16 %v250
        %v379 = vunpack.c.l.b16 %v251
        %v380 = vunpack.c.l.b16 %v252
        %v381 = vunpack.c.l.b16 %v253
        %v382 = vunpack.c.l.b16 %v254
        %v383 = vunpack.c.l.b16 %v255
        %v384 = vunpack.c.l.b16 %v256
        %v385 = vunpack.c.l.b16 %v257
        %v386 = vunpack.c.l.b16 %v258
        %v387 = vunpack.c.l.b16 %v259
        %v388 = vunpack.c.l.b16 %v260
        %v389 = vunpack.c.l.b16 %v261
        %v390 = vunpack.c.l.b16 %v262
        %v391 = vunpack.c.l.b16 %v263
        %v392 = vunpack.c.l.b16 %v264
        %v393 = vunpack.c.l.b16 %v265
        %v394 = vunpack.c.l.b16 %v266
        %v395 = vunpack.c.l.b16 %v267
        %v396 = vunpack.c.l.b16 %v268
        %v397 = vunpack.c.l.b16 %v269
        %v398 = vunpack.c.l.b16 %v270
        %v399 = vunpack.c.l.b16 %v271
        %v400 = vunpack.c.l.b16 %v272
        %v401 = vunpack.c.l.b16 %v273
        %v402 = vunpack.c.l.b16 %v274
        %v403 = vunpack.c.l.b16 %v275
        %v404 = vunpack.c.l.b16 %v276
        %v405 = vunpack.c.l.b16 %v277
        %v406 = vunpack.c.l.b16 %v278
        %v407 = vunpack.c.l.b16 %v279
        %v408 = vunpack.c.l.b16 %v280
        %v409 = vunpack.c.l.b16 %v281
        %v410 = vunpack.c.l.b16 %v282
        %v411 = vunpack.c.l.b16 %v283
        %v412 = vunpack.c.l.b16 %v284
        %v413 = vunpack.c.l.b16 %v285
        %v414 = vunpack.c.l.b16 %v286
        %v415 = vunpack.c.l.b16 %v287
        %v416 = vunpack.c.l.b16 %v288
        %v417 = vunpack.c.l.b16 %v289
        %v418 = vunpack.c.l.b16 %v290
        %v419 = vunpack.c.l.b16 %v291
        %v420 = vunpack.c.l.b16 %v292
        %v421 = vunpack.c.l.b16 %v293
        %v422 = vunpack.c.l.b16 %v294
        %v423 = vunpack.c.l.b16 %v295
        %v424 = vunpack.c.l.b16 %v296
        %v425 = vunpack.c.l.b16 %v297
        %v426 = vunpack.c.l.b16 %v298
        %v427 = vunpack.c.l.b16 %v299
        %v428 = vunpack.c.l.b16 %v300
        %v429 = vunpack.c.l.b16 %v301
        %v430 = vunpack.c.l.b16 %v302
        %v431 = vunpack.c.l.b16 %v303
        %v432 = vunpack.c.l.b16 %v304
        %v433 = vunpack.c.l.b16 %v305
        %v434 = vunpack.c.l.b16 %v306
        %v435 = vunpack.c.l.b16 %v307
        %v436 = vunpack.c.l.b16 %v308
        %v437 = vunpack.c.l.b16 %v309
        %v438 = vunpack.c.l.b16 %v310
        %v439 = vunpack.c.l.b16 %v311
        %v440 = vunpack.c.l.b16 %v312
        %v441 = vpack.c.b16 %v378, %v377
        %v442 = vpack.c.b16 %v380, %v379
        %v443 = vpack.c.b16 %v382, %v381
        %v444 = vpack.c.b16 %v384, %v383
        %v445 = vpack.c.b16 %v386, %v385
        %v446 = vpack.c.b16 %v388, %v387
        %v447 = vpack.c.b16 %v390, %v389
        %v448 = vpack.c.b16 %v392, %v391
        %v449 = vpack.c.b16 %v394, %v393
        %v450 = vpack.c.b16 %v396, %v395
        %v451 = vpack.c.b16 %v398, %v397
        %v452 = vpack.c.b16 %v400, %v399
        %v453 = vpack.c.b16 %v402, %v401
        %v454 = vpack.c.b16 %v404, %v403
        %v455 = vpack.c.b16 %v406, %v405
        %v456 = vpack.c.b16 %v408, %v407
        %v457 = vpack.c.b16 %v410, %v409
        %v458 = vpack.c.b16 %v412, %v411
        %v459 = vpack.c.b16 %v414, %v413
        %v460 = vpack.c.b16 %v416, %v415
        %v461 = vpack.c.b16 %v418, %v417
        %v462 = vpack.c.b16 %v420, %v419
        %v463 = vpack.c.b16 %v422, %v421
        %v464 = vpack.c.b16 %v424, %v423
        %v465 = vpack.c.b16 %v426, %v425
        %v466 = vpack.c.b16 %v428, %v427
        %v467 = vpack.c.b16 %v430, %v429
        %v468 = vpack.c.b16 %v432, %v431
        %v469 = vpack.c.b16 %v434, %v433
        %v470 = vpack.c.b16 %v436, %v435
        %v471 = vpack.c.b16 %v438, %v437
        %v472 = vpack.c.b16 %v440, %v439
        %505 = vmatprep.subr.bf16.mxu0 0
        %506 = vmatpush1.bf16.msra.mxu0 %v441
        %507 = vmatprep.subr.bf16.mxu0 0
        %508 = vmatpush1.bf16.msra.mxu0 %v442
        %509 = vmatprep.subr.bf16.mxu0 0
        %510 = vmatpush1.bf16.msra.mxu0 %v443
        %511 = vmatprep.subr.bf16.mxu0 0
        %512 = vmatpush1.bf16.msra.mxu0 %v444
        %513 = vmatprep.subr.bf16.mxu0 0
        %514 = vmatpush1.bf16.msra.mxu0 %v445
        %515 = vmatprep.subr.bf16.mxu0 0
        %516 = vmatpush1.bf16.msra.mxu0 %v446
        %517 = vmatprep.subr.bf16.mxu0 0
        %518 = vmatpush1.bf16.msra.mxu0 %v447
        %519 = vmatprep.subr.bf16.mxu0 0
        %520 = vmatpush1.bf16.msra.mxu0 %v448
        %521 = vmatprep.subr.bf16.mxu0 0
        %522 = vmatpush1.bf16.msra.mxu0 %v449
        %523 = vmatprep.subr.bf16.mxu0 0
        %524 = vmatpush1.bf16.msra.mxu0 %v450
        %525 = vmatprep.subr.bf16.mxu0 0
        %526 = vmatpush1.bf16.msra.mxu0 %v451
        %527 = vmatprep.subr.bf16.mxu0 0
        %528 = vmatpush1.bf16.msra.mxu0 %v452
        %529 = vmatprep.subr.bf16.mxu0 0
        %530 = vmatpush1.bf16.msra.mxu0 %v453
        %531 = vmatprep.subr.bf16.mxu0 0
        %532 = vmatpush1.bf16.msra.mxu0 %v454
        %533 = vmatprep.subr.bf16.mxu0 0
        %534 = vmatpush1.bf16.msra.mxu0 %v455
        %535 = vmatprep.subr.bf16.mxu0 0
        %536 = vmatpush1.bf16.msra.mxu0 %v456
        %537 = vmatprep.mubr.bf16.mxu0 %v242
        %538 = vmatmul.mubr.bf16.gmra.mrb[0].mxu0 %v241
        %v539 = vpop.f32.mrb[0].mxu0
        %v540 = vadd.f32 0.0, %v539
        %v541 = vpop.f32.mrb[0].mxu0
        %v542 = vpop.f32.mrb[0].mxu0
        %v543 = vadd.f32 0.0, %v542
        %v544 = vpop.f32.mrb[0].mxu0
        %545 = vmatprep.mubr.bf16.mxu0 %v246
        %546 = vmatmul.mubr.bf16.gmra.mrb[0].mxu0 %v245
        %v547 = vpop.f32.mrb[0].mxu0
        %v548 = vadd.f32 0.0, %v547
        %v549 = vpop.f32.mrb[0].mxu0
        %v550 = vpop.f32.mrb[0].mxu0
        %v551 = vadd.f32 0.0, %v550
        %v552 = vpop.f32.mrb[0].mxu0
        %553 = vdwg.mxu0
        %554 = vmatprep.subr.bf16.mxu0 0
        %555 = vmatpush1.bf16.msra.mxu0 %v457
        %556 = vmatprep.subr.bf16.mxu0 0
        %557 = vmatpush1.bf16.msra.mxu0 %v458
        %558 = vmatprep.subr.bf16.mxu0 0
        %559 = vmatpush1.bf16.msra.mxu0 %v459
        %560 = vmatprep.subr.bf16.mxu0 0
        %561 = vmatpush1.bf16.msra.mxu0 %v460
        %562 = vmatprep.subr.bf16.mxu0 0
        %563 = vmatpush1.bf16.msra.mxu0 %v461
        %564 = vmatprep.subr.bf16.mxu0 0
        %565 = vmatpush1.bf16.msra.mxu0 %v462
        %566 = vmatprep.subr.bf16.mxu0 0
        %567 = vmatpush1.bf16.msra.mxu0 %v463
        %568 = vmatprep.subr.bf16.mxu0 0
        %569 = vmatpush1.bf16.msra.mxu0 %v464
        %570 = vmatprep.subr.bf16.mxu0 0
        %571 = vmatpush1.bf16.msra.mxu0 %v465
        %572 = vmatprep.subr.bf16.mxu0 0
        %573 = vmatpush1.bf16.msra.mxu0 %v466
        %574 = vmatprep.subr.bf16.mxu0 0
        %575 = vmatpush1.bf16.msra.mxu0 %v467
        %576 = vmatprep.subr.bf16.mxu0 0
        %577 = vmatpush1.bf16.msra.mxu0 %v468
        %578 = vmatprep.subr.bf16.mxu0 0
        %579 = vmatpush1.bf16.msra.mxu0 %v469
        %580 = vmatprep.subr.bf16.mxu0 0
        %581 = vmatpush1.bf16.msra.mxu0 %v470
        %582 = vmatprep.subr.bf16.mxu0 0
        %583 = vmatpush1.bf16.msra.mxu0 %v471
        %584 = vmatprep.subr.bf16.mxu0 0
        %585 = vmatpush1.bf16.msra.mxu0 %v472
        %586 = vmatprep.mubr.bf16.mxu0 %v244
        %587 = vmatmul.mubr.bf16.gmra.mrb[0].mxu0 %v243
        %v588 = vpop.f32.mrb[0].mxu0
        %v589 = vadd.f32 %v540, %v588
        %v590 = vpop.f32.mrb[0].mxu0
        %v591 = vpop.f32.mrb[0].mxu0
        %v592 = vadd.f32 %v543, %v591
        %v593 = vpop.f32.mrb[0].mxu0
        %594 = vmatprep.mubr.bf16.mxu0 %v248
        %595 = vmatmul.mubr.bf16.gmra.mrb[0].mxu0 %v247
        %v596 = vpop.f32.mrb[0].mxu0
        %v597 = vadd.f32 %v548, %v596
        %v598 = vpop.f32.mrb[0].mxu0
        %v599 = vpop.f32.mrb[0].mxu0
        %v600 = vadd.f32 %v551, %v599
        %v601 = vpop.f32.mrb[0].mxu0
        %602 = vdwg.mxu0
        %v603 = vmul.f32 %v589, %v237
        %v604 = vmul.f32 %v592, %v238
        %v605 = vmul.f32 %v597, %v239
        %v606 = vmul.f32 %v600, %v240
        %607 = vst [vmem:[%s177] sm:$0xff] %v603
        %608 = vst [vmem:[%s177 + $0x8] sm:$0xff] %v604
        %609 = vst [vmem:[%s177 + $0x10] sm:$0xff] %v605
        %610 = vst [vmem:[%s177 + $0x18] sm:$0xff] %v606
        %s611 = sand.u32 %s75, 1
        %s612 = scalar_lea.sflag [#allocation4], %s611
        %s613 = sand.u32 %s75, 1
        %s614 = smul.addr %s613, 32
        %s615 = scalar_lea.vmem [#allocation7], %s614
        // Predicated region
        $region37: #{tpu_custom_call.1} parent=27 // pred_check
          %p616 = pneg %p85
        $region38: #{tpu_custom_call.1} parent=27 // pred_check_branch
          %618 = sbr.rel (%p616) target = $region40
        $region39: #{tpu_custom_call.1} parent=27 // pred_region
          %s619 = smul.u32 4, %s20
          %s621 = ssub.s32 512, 512
          %622 = vsyncadd %s612, %s621
          %s623 = smul.addr %s619, 128
          %s624 = scalar_lea.hbm %s2, %s623
          %s625 = sshll.u32 %s615, 4
          %s626 = int_to_ptr.vmem [resolvable:$true] %s625
          %631 = dma.vmem_to_hbm [thread:$0]  %s626, 512, %s624, %s612, 128, 128, 8
        $region40: #{tpu_custom_call.1} parent=27 // pred_fallthru
          _
      $region28: #{tpu_custom_call.1} parent=5 // pred_fallthru
        _
      %p632 = scmp.le.s32.totalorder 2, %s15
      // Predicated region
      $region41: #{tpu_custom_call.1} parent=5 // pred_check
        %p633 = pneg %p632
      $region42: #{tpu_custom_call.1} parent=5 // pred_check_branch
        %635 = sbr.rel (%p633) target = $region44
      $region43: #{tpu_custom_call.1} parent=5 // pred_region
        %s636 = ssub.s32 %s15, 2
        // Predicated region
        $region45: #{tpu_custom_call.1} parent=43 // pred_check
          %p637 = pneg %p91
        $region46: #{tpu_custom_call.1} parent=43 // pred_check_branch
          %639 = sbr.rel (%p637) target = $region48
        $region47: #{tpu_custom_call.1} parent=43 // pred_region
          %s640 = sand.u32 %s76, 1
          %s641 = scalar_lea.sflag [#allocation4], %s640
          %s642 = sand.u32 %s76, 1
          %s643 = smul.addr %s642, 32
          %s644 = scalar_lea.vmem [#allocation7], %s643
          %645 = dma.done %s641, 512
        $region48: #{tpu_custom_call.1} parent=43 // pred_fallthru
          _
      $region44: #{tpu_custom_call.1} parent=5 // pred_fallthru
        _
    $region6: #{tpu_custom_call.1} parent=1 // loop_footer
      %s19 = sadd.s32 1, %s15
    $region7: #{tpu_custom_call.1} parent=1 // loop_footer_branch
      %14 = sbr.rel target = $region3
    $region8: #{tpu_custom_call.1} parent=1 // loop_exit
      _
    %646 = vsyncpa [#allocation3], 1
    %s647 = scalar_lea.sflag [#allocation3], 1
    %648 = vsyncpa %s647, 1
    %649 = vsyncpa [#allocation6], 1
    %650 = vsyncpa [#allocation4], 1
    %s651 = scalar_lea.sflag [#allocation4], 1
    %652 = vsyncpa %s651, 1

</llo_original>
